<compile_context>
chip_gen: v5e
topology: v5e:2x2
jax: 0.10.0
libtpu: 0.0.40
codegen_flags: <defaults>
</compile_context>

<pallas_src>
import functools

import jax
import jax.numpy as jnp
from jax import lax
from jax.experimental import pallas as pl
from jax.experimental.pallas import tpu as pltpu


def _lstm_kernel(x2d_ref, wih_ref, bias_ref, whh_ref, out_ref, *, T, Bp, H):
    """Single-invocation LSTM: fused input projection + serial recurrence.

    x2d_ref  : (T*Bp, D)  bf16  time-major flattened inputs (row = t*Bp + b)
    wih_ref  : (D, 4H)    bf16  W_ih^T, gate columns permuted to i,f,o,g
    bias_ref : (1, 4H)    f32   (b_ih + b_hh), permuted to i,f,o,g
    whh_ref  : (H, 4H)    bf16  W_hh^T, gate columns permuted to i,f,o,g
    out_ref  : (Bp, T*H)  f32   batch-first, lane-dense (T*H multiple of 128)
    """
    # Prologue, off the serial chain: one (T*Bp, D) x (D, 4H) bf16 MXU matmul
    # with the fused bias.  Replaces the former wrapper einsum + HBM round trip.
    xproj = jnp.dot(x2d_ref[...], wih_ref[...],
                    preferred_element_type=jnp.float32) + bias_ref[...]

    # Recurrent weight loaded once; resident in vregs for all T steps.
    whh = whh_ref[...]                                     # (H, 4H) bf16

    h = jnp.zeros((Bp, H), jnp.float32)
    c = jnp.zeros((Bp, H), jnp.float32)

    # T is small and static: fully unrolled Python loop -> every slice below is
    # static (vreg-aligned xproj row blocks, fixed lane windows on out_ref).
    for t in range(T):
        # Serial critical path: only the (Bp,H)x(H,4H) bf16 matmul lives here.
        gates = xproj[t * Bp:(t + 1) * Bp, :] + jnp.dot(
            h.astype(jnp.bfloat16), whh, preferred_element_type=jnp.float32)

        # Gate order permuted in the wrapper to i, f, o, g: a single sigmoid
        # covers the first 3H columns, one tanh covers the last H.
        sig = jax.nn.sigmoid(gates[:, :3 * H])
        i_g = sig[:, 0 * H:1 * H]
        f_g = sig[:, 1 * H:2 * H]
        o_g = sig[:, 2 * H:3 * H]
        g_g = jnp.tanh(gates[:, 3 * H:])

        c = f_g * c + i_g * g_g
        h = o_g * jnp.tanh(c)

        # Batch-first, lane-dense output slab: one bulk (Bp, T*H) HBM
        # writeback at the end; wrapper reshape to (B, T, H) is free.
        out_ref[:, t * H:(t + 1) * H] = h


def _permute_ifog(m, H):
    """Reorder torch LSTM gate blocks (i,f,g,o) -> (i,f,o,g) along axis 0."""
    return jnp.concatenate([m[:2 * H], m[3 * H:4 * H], m[2 * H:3 * H]], axis=0)


@functools.partial(jax.jit, static_argnames=("bottleneck_size",))
def lstm_autoencoder_forward(x, w_ih, w_hh, b_ih, b_hh, *, bottleneck_size):
    """Forward of lstm_autoencoder.forward (returns encoded_seq).

    x    : (B, T, D) float32, batch_first like the PyTorch module
    w_ih : (4H, D), w_hh : (4H, H), b_ih/b_hh : (4H,)  -- PyTorch LSTM layout
    returns encoded_seq: (B, T, H)
    """
    B, T, D = x.shape
    H = bottleneck_size

    # Wrapper-side (free) weight prep: gate reorder to i,f,o,g + fused bias.
    wih_t = jnp.transpose(_permute_ifog(w_ih.astype(jnp.float32), H))   # (D,4H)
    whh_t = jnp.transpose(_permute_ifog(w_hh.astype(jnp.float32), H))   # (H,4H)
    bias = _permute_ifog((b_ih + b_hh).astype(jnp.float32), H)          # (4H,)

    # Pad batch to a full sublane tile (8) and flatten time-major so each
    # time step is a vreg-aligned row block inside the kernel.
    Bp = ((B + 7) // 8) * 8
    x_tm = jnp.transpose(x.astype(jnp.float32), (1, 0, 2))              # (T,B,D)
    if Bp != B:
        x_tm = jnp.pad(x_tm, ((0, 0), (0, Bp - B), (0, 0)))
    x2d = x_tm.reshape(T * Bp, D).astype(jnp.bfloat16)                  # (T*Bp,D)

    out2d = pl.pallas_call(
        functools.partial(_lstm_kernel, T=T, Bp=Bp, H=H),
        out_shape=jax.ShapeDtypeStruct((Bp, T * H), jnp.float32),
        # Single invocation: all operands are a few KB -> fully VMEM-resident
        # (fits trivially on v5e/v6e 128 MiB and v7x 64 MiB).
        in_specs=[
            pl.BlockSpec(memory_space=pltpu.MemorySpace.VMEM),   # x2d
            pl.BlockSpec(memory_space=pltpu.MemorySpace.VMEM),   # W_ih^T
            pl.BlockSpec(memory_space=pltpu.MemorySpace.VMEM),   # fused bias
            pl.BlockSpec(memory_space=pltpu.MemorySpace.VMEM),   # W_hh^T
        ],
        out_specs=pl.BlockSpec(memory_space=pltpu.MemorySpace.VMEM),
    )(x2d, wih_t.astype(jnp.bfloat16), bias.reshape(1, 4 * H),
      whh_t.astype(jnp.bfloat16))

    # Free row-major reshape (no transpose) + drop batch padding.
    return out2d[:B].reshape(B, T, H)


def lstm_reference(x, w_ih, w_hh, b_ih, b_hh):
    """Pure-JAX reference matching torch.nn.LSTM (batch_first, 1 layer)."""
    B, T, D = x.shape
    H = w_hh.shape[1]

    def step(carry, x_t):
        h, c = carry
        gates = x_t @ w_ih.T + b_ih + h @ w_hh.T + b_hh
        i, f, g, o = jnp.split(gates, 4, axis=-1)
        i, f, o = jax.nn.sigmoid(i), jax.nn.sigmoid(f), jax.nn.sigmoid(o)
        g = jnp.tanh(g)
        c = f * c + i * g
        h = o * jnp.tanh(c)
        return (h, c), h

    init = (jnp.zeros((B, H), jnp.float32), jnp.zeros((B, H), jnp.float32))
    _, hs = lax.scan(step, init, jnp.transpose(x, (1, 0, 2)))
    return jnp.transpose(hs, (1, 0, 2))


if __name__ == "__main__":
    # Small shapes consistent with the module: batch=2, seq=8,
    # input_size=16, bottleneck_size=32 (LSTM hidden size).
    B, T, D, H = 2, 8, 16, 32

    key = jax.random.PRNGKey(0)
    kx, k1, k2, k3, k4 = jax.random.split(key, 5)

    x = jax.random.normal(kx, (B, T, D), dtype=jnp.float32)

    # Deterministic params, PyTorch-style uniform(-1/sqrt(H), 1/sqrt(H)).
    bound = 1.0 / jnp.sqrt(jnp.float32(H))
    w_ih = jax.random.uniform(k1, (4 * H, D), jnp.float32, -bound, bound)
    w_hh = jax.random.uniform(k2, (4 * H, H), jnp.float32, -bound, bound)
    b_ih = jax.random.uniform(k3, (4 * H,), jnp.float32, -bound, bound)
    b_hh = jax.random.uniform(k4, (4 * H,), jnp.float32, -bound, bound)

    encoded_seq = lstm_autoencoder_forward(
        x, w_ih, w_hh, b_ih, b_hh, bottleneck_size=H
    )
    encoded_seq = jax.block_until_ready(encoded_seq)

    ref = lstm_reference(x, w_ih, w_hh, b_ih, b_hh)
    assert encoded_seq.shape == (B, T, H)
    # bf16 MXU operands (f32 accumulate): hidden states are in [-1, 1], so an
    # absolute/relative tolerance of 1e-2 is comfortably above the observed
    # ~1e-3 quantization error while still validating the recurrence.
    assert jnp.allclose(encoded_seq, ref, rtol=1e-2, atol=1e-2)

    print("KERNEL_OK")
</pallas_src>

<mosaic_0001>
module attributes {stable_mosaic.version = 11 : i64} {
  func.func @_lstm_kernel(%arg0: memref<64x16xbf16, #tpu.memory_space<vmem>>, %arg1: memref<16x128xbf16, #tpu.memory_space<vmem>>, %arg2: memref<1x128xf32, #tpu.memory_space<vmem>>, %arg3: memref<32x128xbf16, #tpu.memory_space<vmem>>, %arg4: memref<8x256xf32, #tpu.memory_space<vmem>>) attributes {dimension_semantics = [], scalar_prefetch = 0 : i64, scratch_operands = 0 : i64, tpu.core_type = #tpu.core_type<tc>} {
    %c0 = arith.constant 0 : index
    %c0_0 = arith.constant 0 : index
    %0 = vector.load %arg0[%c0, %c0_0] : memref<64x16xbf16, #tpu.memory_space<vmem>>, vector<64x16xbf16>
    %c0_1 = arith.constant 0 : index
    %c0_2 = arith.constant 0 : index
    %1 = vector.load %arg1[%c0_1, %c0_2] : memref<16x128xbf16, #tpu.memory_space<vmem>>, vector<16x128xbf16>
    %cst = arith.constant dense<0.000000e+00> : vector<64x128xf32>
    %2 = tpu.matmul %0, %1, %cst {dimension_numbers = #tpu.dot_dimension_numbers<[1], [0], [0], [1], [0, 0, 1, 1], [], []>} : vector<64x16xbf16>, vector<16x128xbf16>, vector<64x128xf32> -> vector<64x128xf32>
    %c0_3 = arith.constant 0 : index
    %c0_4 = arith.constant 0 : index
    %3 = vector.load %arg2[%c0_3, %c0_4] : memref<1x128xf32, #tpu.memory_space<vmem>>, vector<1x128xf32>
    %4 = vector.broadcast %3 : vector<1x128xf32> to vector<64x128xf32>
    %5 = arith.addf %2, %4 : vector<64x128xf32>
    %c0_5 = arith.constant 0 : index
    %c0_6 = arith.constant 0 : index
    %6 = vector.load %arg3[%c0_5, %c0_6] : memref<32x128xbf16, #tpu.memory_space<vmem>>, vector<32x128xbf16>
    %cst_7 = arith.constant 0.000000e+00 : f32
    %7 = vector.broadcast %cst_7 : f32 to vector<8x32xf32>
    %cst_8 = arith.constant 0.000000e+00 : f32
    %8 = vector.broadcast %cst_8 : f32 to vector<8x32xf32>
    %9 = vector.extract_strided_slice %5 {offsets = [0, 0], sizes = [8, 128], strides = [1, 1]} : vector<64x128xf32> to vector<8x128xf32>
    %10 = arith.truncf %7 : vector<8x32xf32> to vector<8x32xbf16>
    %cst_9 = arith.constant dense<0.000000e+00> : vector<8x128xf32>
    %11 = tpu.matmul %10, %6, %cst_9 {dimension_numbers = #tpu.dot_dimension_numbers<[1], [0], [0], [1], [0, 0, 1, 1], [], []>} : vector<8x32xbf16>, vector<32x128xbf16>, vector<8x128xf32> -> vector<8x128xf32>
    %12 = arith.addf %9, %11 : vector<8x128xf32>
    %13 = vector.extract_strided_slice %12 {offsets = [0, 0], sizes = [8, 96], strides = [1, 1]} : vector<8x128xf32> to vector<8x96xf32>
    %14 = arith.negf %13 : vector<8x96xf32>
    %15 = math.exp %14 : vector<8x96xf32>
    %cst_10 = arith.constant 1.000000e+00 : f32
    %16 = vector.broadcast %cst_10 : f32 to vector<8x96xf32>
    %17 = arith.addf %16, %15 : vector<8x96xf32>
    %18 = arith.divf %16, %17 : vector<8x96xf32>
    %19 = vector.extract_strided_slice %18 {offsets = [0, 0], sizes = [8, 32], strides = [1, 1]} : vector<8x96xf32> to vector<8x32xf32>
    %20 = vector.extract_strided_slice %18 {offsets = [0, 32], sizes = [8, 32], strides = [1, 1]} : vector<8x96xf32> to vector<8x32xf32>
    %21 = vector.extract_strided_slice %18 {offsets = [0, 64], sizes = [8, 32], strides = [1, 1]} : vector<8x96xf32> to vector<8x32xf32>
    %22 = vector.extract_strided_slice %12 {offsets = [0, 96], sizes = [8, 32], strides = [1, 1]} : vector<8x128xf32> to vector<8x32xf32>
    %23 = math.tanh %22 : vector<8x32xf32>
    %24 = arith.mulf %20, %8 : vector<8x32xf32>
    %25 = arith.mulf %19, %23 : vector<8x32xf32>
    %26 = arith.addf %24, %25 : vector<8x32xf32>
    %27 = math.tanh %26 : vector<8x32xf32>
    %28 = arith.mulf %21, %27 : vector<8x32xf32>
    %c0_11 = arith.constant 0 : index
    %c0_12 = arith.constant 0 : index
    %29 = vector.load %arg4[%c0_11, %c0_12] : memref<8x256xf32, #tpu.memory_space<vmem>>, vector<8x32xf32>
    tpu.vector_store %arg4[%c0_11, %c0_12], %28 {strides = array<i32>} : memref<8x256xf32, #tpu.memory_space<vmem>>, vector<8x32xf32>,
    %30 = vector.extract_strided_slice %5 {offsets = [8, 0], sizes = [8, 128], strides = [1, 1]} : vector<64x128xf32> to vector<8x128xf32>
    %31 = arith.truncf %28 : vector<8x32xf32> to vector<8x32xbf16>
    %cst_13 = arith.constant dense<0.000000e+00> : vector<8x128xf32>
    %32 = tpu.matmul %31, %6, %cst_13 {dimension_numbers = #tpu.dot_dimension_numbers<[1], [0], [0], [1], [0, 0, 1, 1], [], []>} : vector<8x32xbf16>, vector<32x128xbf16>, vector<8x128xf32> -> vector<8x128xf32>
    %33 = arith.addf %30, %32 : vector<8x128xf32>
    %34 = vector.extract_strided_slice %33 {offsets = [0, 0], sizes = [8, 96], strides = [1, 1]} : vector<8x128xf32> to vector<8x96xf32>
    %35 = arith.negf %34 : vector<8x96xf32>
    %36 = math.exp %35 : vector<8x96xf32>
    %cst_14 = arith.constant 1.000000e+00 : f32
    %37 = vector.broadcast %cst_14 : f32 to vector<8x96xf32>
    %38 = arith.addf %37, %36 : vector<8x96xf32>
    %39 = arith.divf %37, %38 : vector<8x96xf32>
    %40 = vector.extract_strided_slice %39 {offsets = [0, 0], sizes = [8, 32], strides = [1, 1]} : vector<8x96xf32> to vector<8x32xf32>
    %41 = vector.extract_strided_slice %39 {offsets = [0, 32], sizes = [8, 32], strides = [1, 1]} : vector<8x96xf32> to vector<8x32xf32>
    %42 = vector.extract_strided_slice %39 {offsets = [0, 64], sizes = [8, 32], strides = [1, 1]} : vector<8x96xf32> to vector<8x32xf32>
    %43 = vector.extract_strided_slice %33 {offsets = [0, 96], sizes = [8, 32], strides = [1, 1]} : vector<8x128xf32> to vector<8x32xf32>
    %44 = math.tanh %43 : vector<8x32xf32>
    %45 = arith.mulf %41, %26 : vector<8x32xf32>
    %46 = arith.mulf %40, %44 : vector<8x32xf32>
    %47 = arith.addf %45, %46 : vector<8x32xf32>
    %48 = math.tanh %47 : vector<8x32xf32>
    %49 = arith.mulf %42, %48 : vector<8x32xf32>
    %c0_15 = arith.constant 0 : index
    %c32 = arith.constant 32 : index
    %50 = vector.load %arg4[%c0_15, %c32] : memref<8x256xf32, #tpu.memory_space<vmem>>, vector<8x32xf32>
    tpu.vector_store %arg4[%c0_15, %c32], %49 {strides = array<i32>} : memref<8x256xf32, #tpu.memory_space<vmem>>, vector<8x32xf32>,
    %51 = vector.extract_strided_slice %5 {offsets = [16, 0], sizes = [8, 128], strides = [1, 1]} : vector<64x128xf32> to vector<8x128xf32>
    %52 = arith.truncf %49 : vector<8x32xf32> to vector<8x32xbf16>
    %cst_16 = arith.constant dense<0.000000e+00> : vector<8x128xf32>
    %53 = tpu.matmul %52, %6, %cst_16 {dimension_numbers = #tpu.dot_dimension_numbers<[1], [0], [0], [1], [0, 0, 1, 1], [], []>} : vector<8x32xbf16>, vector<32x128xbf16>, vector<8x128xf32> -> vector<8x128xf32>
    %54 = arith.addf %51, %53 : vector<8x128xf32>
    %55 = vector.extract_strided_slice %54 {offsets = [0, 0], sizes = [8, 96], strides = [1, 1]} : vector<8x128xf32> to vector<8x96xf32>
    %56 = arith.negf %55 : vector<8x96xf32>
    %57 = math.exp %56 : vector<8x96xf32>
    %cst_17 = arith.constant 1.000000e+00 : f32
    %58 = vector.broadcast %cst_17 : f32 to vector<8x96xf32>
    %59 = arith.addf %58, %57 : vector<8x96xf32>
    %60 = arith.divf %58, %59 : vector<8x96xf32>
    %61 = vector.extract_strided_slice %60 {offsets = [0, 0], sizes = [8, 32], strides = [1, 1]} : vector<8x96xf32> to vector<8x32xf32>
    %62 = vector.extract_strided_slice %60 {offsets = [0, 32], sizes = [8, 32], strides = [1, 1]} : vector<8x96xf32> to vector<8x32xf32>
    %63 = vector.extract_strided_slice %60 {offsets = [0, 64], sizes = [8, 32], strides = [1, 1]} : vector<8x96xf32> to vector<8x32xf32>
    %64 = vector.extract_strided_slice %54 {offsets = [0, 96], sizes = [8, 32], strides = [1, 1]} : vector<8x128xf32> to vector<8x32xf32>
    %65 = math.tanh %64 : vector<8x32xf32>
    %66 = arith.mulf %62, %47 : vector<8x32xf32>
    %67 = arith.mulf %61, %65 : vector<8x32xf32>
    %68 = arith.addf %66, %67 : vector<8x32xf32>
    %69 = math.tanh %68 : vector<8x32xf32>
    %70 = arith.mulf %63, %69 : vector<8x32xf32>
    %c0_18 = arith.constant 0 : index
    %c64 = arith.constant 64 : index
    %71 = vector.load %arg4[%c0_18, %c64] : memref<8x256xf32, #tpu.memory_space<vmem>>, vector<8x32xf32>
    tpu.vector_store %arg4[%c0_18, %c64], %70 {strides = array<i32>} : memref<8x256xf32, #tpu.memory_space<vmem>>, vector<8x32xf32>,
    %72 = vector.extract_strided_slice %5 {offsets = [24, 0], sizes = [8, 128], strides = [1, 1]} : vector<64x128xf32> to vector<8x128xf32>
    %73 = arith.truncf %70 : vector<8x32xf32> to vector<8x32xbf16>
    %cst_19 = arith.constant dense<0.000000e+00> : vector<8x128xf32>
    %74 = tpu.matmul %73, %6, %cst_19 {dimension_numbers = #tpu.dot_dimension_numbers<[1], [0], [0], [1], [0, 0, 1, 1], [], []>} : vector<8x32xbf16>, vector<32x128xbf16>, vector<8x128xf32> -> vector<8x128xf32>
    %75 = arith.addf %72, %74 : vector<8x128xf32>
    %76 = vector.extract_strided_slice %75 {offsets = [0, 0], sizes = [8, 96], strides = [1, 1]} : vector<8x128xf32> to vector<8x96xf32>
    %77 = arith.negf %76 : vector<8x96xf32>
    %78 = math.exp %77 : vector<8x96xf32>
    %cst_20 = arith.constant 1.000000e+00 : f32
    %79 = vector.broadcast %cst_20 : f32 to vector<8x96xf32>
    %80 = arith.addf %79, %78 : vector<8x96xf32>
    %81 = arith.divf %79, %80 : vector<8x96xf32>
    %82 = vector.extract_strided_slice %81 {offsets = [0, 0], sizes = [8, 32], strides = [1, 1]} : vector<8x96xf32> to vector<8x32xf32>
    %83 = vector.extract_strided_slice %81 {offsets = [0, 32], sizes = [8, 32], strides = [1, 1]} : vector<8x96xf32> to vector<8x32xf32>
    %84 = vector.extract_strided_slice %81 {offsets = [0, 64], sizes = [8, 32], strides = [1, 1]} : vector<8x96xf32> to vector<8x32xf32>
    %85 = vector.extract_strided_slice %75 {offsets = [0, 96], sizes = [8, 32], strides = [1, 1]} : vector<8x128xf32> to vector<8x32xf32>
    %86 = math.tanh %85 : vector<8x32xf32>
    %87 = arith.mulf %83, %68 : vector<8x32xf32>
    %88 = arith.mulf %82, %86 : vector<8x32xf32>
    %89 = arith.addf %87, %88 : vector<8x32xf32>
    %90 = math.tanh %89 : vector<8x32xf32>
    %91 = arith.mulf %84, %90 : vector<8x32xf32>
    %c0_21 = arith.constant 0 : index
    %c96 = arith.constant 96 : index
    %92 = vector.load %arg4[%c0_21, %c96] : memref<8x256xf32, #tpu.memory_space<vmem>>, vector<8x32xf32>
    tpu.vector_store %arg4[%c0_21, %c96], %91 {strides = array<i32>} : memref<8x256xf32, #tpu.memory_space<vmem>>, vector<8x32xf32>,
    %93 = vector.extract_strided_slice %5 {offsets = [32, 0], sizes = [8, 128], strides = [1, 1]} : vector<64x128xf32> to vector<8x128xf32>
    %94 = arith.truncf %91 : vector<8x32xf32> to vector<8x32xbf16>
    %cst_22 = arith.constant dense<0.000000e+00> : vector<8x128xf32>
    %95 = tpu.matmul %94, %6, %cst_22 {dimension_numbers = #tpu.dot_dimension_numbers<[1], [0], [0], [1], [0, 0, 1, 1], [], []>} : vector<8x32xbf16>, vector<32x128xbf16>, vector<8x128xf32> -> vector<8x128xf32>
    %96 = arith.addf %93, %95 : vector<8x128xf32>
    %97 = vector.extract_strided_slice %96 {offsets = [0, 0], sizes = [8, 96], strides = [1, 1]} : vector<8x128xf32> to vector<8x96xf32>
    %98 = arith.negf %97 : vector<8x96xf32>
    %99 = math.exp %98 : vector<8x96xf32>
    %cst_23 = arith.constant 1.000000e+00 : f32
    %100 = vector.broadcast %cst_23 : f32 to vector<8x96xf32>
    %101 = arith.addf %100, %99 : vector<8x96xf32>
    %102 = arith.divf %100, %101 : vector<8x96xf32>
    %103 = vector.extract_strided_slice %102 {offsets = [0, 0], sizes = [8, 32], strides = [1, 1]} : vector<8x96xf32> to vector<8x32xf32>
    %104 = vector.extract_strided_slice %102 {offsets = [0, 32], sizes = [8, 32], strides = [1, 1]} : vector<8x96xf32> to vector<8x32xf32>
    %105 = vector.extract_strided_slice %102 {offsets = [0, 64], sizes = [8, 32], strides = [1, 1]} : vector<8x96xf32> to vector<8x32xf32>
    %106 = vector.extract_strided_slice %96 {offsets = [0, 96], sizes = [8, 32], strides = [1, 1]} : vector<8x128xf32> to vector<8x32xf32>
    %107 = math.tanh %106 : vector<8x32xf32>
    %108 = arith.mulf %104, %89 : vector<8x32xf32>
    %109 = arith.mulf %103, %107 : vector<8x32xf32>
    %110 = arith.addf %108, %109 : vector<8x32xf32>
    %111 = math.tanh %110 : vector<8x32xf32>
    %112 = arith.mulf %105, %111 : vector<8x32xf32>
    %c0_24 = arith.constant 0 : index
    %c128 = arith.constant 128 : index
    %113 = vector.load %arg4[%c0_24, %c128] : memref<8x256xf32, #tpu.memory_space<vmem>>, vector<8x32xf32>
    tpu.vector_store %arg4[%c0_24, %c128], %112 {strides = array<i32>} : memref<8x256xf32, #tpu.memory_space<vmem>>, vector<8x32xf32>,
    %114 = vector.extract_strided_slice %5 {offsets = [40, 0], sizes = [8, 128], strides = [1, 1]} : vector<64x128xf32> to vector<8x128xf32>
    %115 = arith.truncf %112 : vector<8x32xf32> to vector<8x32xbf16>
    %cst_25 = arith.constant dense<0.000000e+00> : vector<8x128xf32>
    %116 = tpu.matmul %115, %6, %cst_25 {dimension_numbers = #tpu.dot_dimension_numbers<[1], [0], [0], [1], [0, 0, 1, 1], [], []>} : vector<8x32xbf16>, vector<32x128xbf16>, vector<8x128xf32> -> vector<8x128xf32>
    %117 = arith.addf %114, %116 : vector<8x128xf32>
    %118 = vector.extract_strided_slice %117 {offsets = [0, 0], sizes = [8, 96], strides = [1, 1]} : vector<8x128xf32> to vector<8x96xf32>
    %119 = arith.negf %118 : vector<8x96xf32>
    %120 = math.exp %119 : vector<8x96xf32>
    %cst_26 = arith.constant 1.000000e+00 : f32
    %121 = vector.broadcast %cst_26 : f32 to vector<8x96xf32>
    %122 = arith.addf %121, %120 : vector<8x96xf32>
    %123 = arith.divf %121, %122 : vector<8x96xf32>
    %124 = vector.extract_strided_slice %123 {offsets = [0, 0], sizes = [8, 32], strides = [1, 1]} : vector<8x96xf32> to vector<8x32xf32>
    %125 = vector.extract_strided_slice %123 {offsets = [0, 32], sizes = [8, 32], strides = [1, 1]} : vector<8x96xf32> to vector<8x32xf32>
    %126 = vector.extract_strided_slice %123 {offsets = [0, 64], sizes = [8, 32], strides = [1, 1]} : vector<8x96xf32> to vector<8x32xf32>
    %127 = vector.extract_strided_slice %117 {offsets = [0, 96], sizes = [8, 32], strides = [1, 1]} : vector<8x128xf32> to vector<8x32xf32>
    %128 = math.tanh %127 : vector<8x32xf32>
    %129 = arith.mulf %125, %110 : vector<8x32xf32>
    %130 = arith.mulf %124, %128 : vector<8x32xf32>
    %131 = arith.addf %129, %130 : vector<8x32xf32>
    %132 = math.tanh %131 : vector<8x32xf32>
    %133 = arith.mulf %126, %132 : vector<8x32xf32>
    %c0_27 = arith.constant 0 : index
    %c160 = arith.constant 160 : index
    %134 = vector.load %arg4[%c0_27, %c160] : memref<8x256xf32, #tpu.memory_space<vmem>>, vector<8x32xf32>
    tpu.vector_store %arg4[%c0_27, %c160], %133 {strides = array<i32>} : memref<8x256xf32, #tpu.memory_space<vmem>>, vector<8x32xf32>,
    %135 = vector.extract_strided_slice %5 {offsets = [48, 0], sizes = [8, 128], strides = [1, 1]} : vector<64x128xf32> to vector<8x128xf32>
    %136 = arith.truncf %133 : vector<8x32xf32> to vector<8x32xbf16>
    %cst_28 = arith.constant dense<0.000000e+00> : vector<8x128xf32>
    %137 = tpu.matmul %136, %6, %cst_28 {dimension_numbers = #tpu.dot_dimension_numbers<[1], [0], [0], [1], [0, 0, 1, 1], [], []>} : vector<8x32xbf16>, vector<32x128xbf16>, vector<8x128xf32> -> vector<8x128xf32>
    %138 = arith.addf %135, %137 : vector<8x128xf32>
    %139 = vector.extract_strided_slice %138 {offsets = [0, 0], sizes = [8, 96], strides = [1, 1]} : vector<8x128xf32> to vector<8x96xf32>
    %140 = arith.negf %139 : vector<8x96xf32>
    %141 = math.exp %140 : vector<8x96xf32>
    %cst_29 = arith.constant 1.000000e+00 : f32
    %142 = vector.broadcast %cst_29 : f32 to vector<8x96xf32>
    %143 = arith.addf %142, %141 : vector<8x96xf32>
    %144 = arith.divf %142, %143 : vector<8x96xf32>
    %145 = vector.extract_strided_slice %144 {offsets = [0, 0], sizes = [8, 32], strides = [1, 1]} : vector<8x96xf32> to vector<8x32xf32>
    %146 = vector.extract_strided_slice %144 {offsets = [0, 32], sizes = [8, 32], strides = [1, 1]} : vector<8x96xf32> to vector<8x32xf32>
    %147 = vector.extract_strided_slice %144 {offsets = [0, 64], sizes = [8, 32], strides = [1, 1]} : vector<8x96xf32> to vector<8x32xf32>
    %148 = vector.extract_strided_slice %138 {offsets = [0, 96], sizes = [8, 32], strides = [1, 1]} : vector<8x128xf32> to vector<8x32xf32>
    %149 = math.tanh %148 : vector<8x32xf32>
    %150 = arith.mulf %146, %131 : vector<8x32xf32>
    %151 = arith.mulf %145, %149 : vector<8x32xf32>
    %152 = arith.addf %150, %151 : vector<8x32xf32>
    %153 = math.tanh %152 : vector<8x32xf32>
    %154 = arith.mulf %147, %153 : vector<8x32xf32>
    %c0_30 = arith.constant 0 : index
    %c192 = arith.constant 192 : index
    %155 = vector.load %arg4[%c0_30, %c192] : memref<8x256xf32, #tpu.memory_space<vmem>>, vector<8x32xf32>
    tpu.vector_store %arg4[%c0_30, %c192], %154 {strides = array<i32>} : memref<8x256xf32, #tpu.memory_space<vmem>>, vector<8x32xf32>,
    %156 = vector.extract_strided_slice %5 {offsets = [56, 0], sizes = [8, 128], strides = [1, 1]} : vector<64x128xf32> to vector<8x128xf32>
    %157 = arith.truncf %154 : vector<8x32xf32> to vector<8x32xbf16>
    %cst_31 = arith.constant dense<0.000000e+00> : vector<8x128xf32>
    %158 = tpu.matmul %157, %6, %cst_31 {dimension_numbers = #tpu.dot_dimension_numbers<[1], [0], [0], [1], [0, 0, 1, 1], [], []>} : vector<8x32xbf16>, vector<32x128xbf16>, vector<8x128xf32> -> vector<8x128xf32>
    %159 = arith.addf %156, %158 : vector<8x128xf32>
    %160 = vector.extract_strided_slice %159 {offsets = [0, 0], sizes = [8, 96], strides = [1, 1]} : vector<8x128xf32> to vector<8x96xf32>
    %161 = arith.negf %160 : vector<8x96xf32>
    %162 = math.exp %161 : vector<8x96xf32>
    %cst_32 = arith.constant 1.000000e+00 : f32
    %163 = vector.broadcast %cst_32 : f32 to vector<8x96xf32>
    %164 = arith.addf %163, %162 : vector<8x96xf32>
    %165 = arith.divf %163, %164 : vector<8x96xf32>
    %166 = vector.extract_strided_slice %165 {offsets = [0, 0], sizes = [8, 32], strides = [1, 1]} : vector<8x96xf32> to vector<8x32xf32>
    %167 = vector.extract_strided_slice %165 {offsets = [0, 32], sizes = [8, 32], strides = [1, 1]} : vector<8x96xf32> to vector<8x32xf32>
    %168 = vector.extract_strided_slice %165 {offsets = [0, 64], sizes = [8, 32], strides = [1, 1]} : vector<8x96xf32> to vector<8x32xf32>
    %169 = vector.extract_strided_slice %159 {offsets = [0, 96], sizes = [8, 32], strides = [1, 1]} : vector<8x128xf32> to vector<8x32xf32>
    %170 = math.tanh %169 : vector<8x32xf32>
    %171 = arith.mulf %167, %152 : vector<8x32xf32>
    %172 = arith.mulf %166, %170 : vector<8x32xf32>
    %173 = arith.addf %171, %172 : vector<8x32xf32>
    %174 = math.tanh %173 : vector<8x32xf32>
    %175 = arith.mulf %168, %174 : vector<8x32xf32>
    %c0_33 = arith.constant 0 : index
    %c224 = arith.constant 224 : index
    %176 = vector.load %arg4[%c0_33, %c224] : memref<8x256xf32, #tpu.memory_space<vmem>>, vector<8x32xf32>
    tpu.vector_store %arg4[%c0_33, %c224], %175 {strides = array<i32>} : memref<8x256xf32, #tpu.memory_space<vmem>>, vector<8x32xf32>,
    return
  }
}

</mosaic_0001>

<llo_original>
// kernel: lstm_autoencoder_forward.1
$region0: #{lstm_autoencoder_forward.1}
  #allocation0 [shape = 'u32[]', space=smem, size = 0x4, offset = 0x4, fixed_abs, tag = 'smem constant byte address 0x4 - core index']
  #allocation1 [shape = 'u32[72,128]{1,0:T(1,128)}', space=vmem, size = 0x9000, scoped, tag = 'internal scratch']
  %s0 = inlined_call_operand.vmem [shape: bf16[64,16], index: 0, kind: input, shape index: {}]
  %s1 = inlined_call_operand.vmem [shape: bf16[16,128], index: 1, kind: input, shape index: {}]
  %s2 = inlined_call_operand.vmem [shape: f32[1,128], index: 2, kind: input, shape index: {}]
  %s3 = inlined_call_operand.vmem [shape: bf16[32,128], index: 3, kind: input, shape index: {}]
  %s4 = inlined_call_operand.vmem [shape: f32[8,256], index: 4, kind: output, shape index: {}]
  %s5 = sld [smem:[#allocation0]]
  $region26: #{lstm_autoencoder_forward.1} parent=0
    _
  %s7 = ssub.s32 1, %s5
  %s8 = scalar_select 0, %s7, %s5
  // Predicated region
  $region2: #{lstm_autoencoder_forward.1} parent=0 // pred_check
    _
  $region3: #{lstm_autoencoder_forward.1} parent=0 // pred_check_branch
    %10 = sbr.rel (0) target = $region5
  $region4: #{lstm_autoencoder_forward.1} parent=0 // pred_region
    _
  $region5: #{lstm_autoencoder_forward.1} parent=0 // pred_fallthru
    _
  // Predicated region
  $region6: #{lstm_autoencoder_forward.1} parent=0 // pred_check
    _
  $region7: #{lstm_autoencoder_forward.1} parent=0 // pred_check_branch
    %12 = sbr.rel (0) target = $region9
  $region8: #{lstm_autoencoder_forward.1} parent=0 // pred_region
    _
  $region9: #{lstm_autoencoder_forward.1} parent=0 // pred_fallthru
    _
  // Predicated region
  $region10: #{lstm_autoencoder_forward.1} parent=0 // pred_check
    _
  $region11: #{lstm_autoencoder_forward.1} parent=0 // pred_check_branch
    %14 = sbr.rel (0) target = $region13
  $region12: #{lstm_autoencoder_forward.1} parent=0 // pred_region
    _
  $region13: #{lstm_autoencoder_forward.1} parent=0 // pred_fallthru
    _
  // Predicated region
  $region14: #{lstm_autoencoder_forward.1} parent=0 // pred_check
    _
  $region15: #{lstm_autoencoder_forward.1} parent=0 // pred_check_branch
    %16 = sbr.rel (0) target = $region17
  $region16: #{lstm_autoencoder_forward.1} parent=0 // pred_region
    _
  $region17: #{lstm_autoencoder_forward.1} parent=0 // pred_fallthru
    _
  %v18 = vld [vmem:[%s0] sm:$0xf]
  %v19 = vld [vmem:[%s0 + $0x4] sm:$0xf]
  %v20 = vld [vmem:[%s0 + $0x8] sm:$0xf]
  %v21 = vld [vmem:[%s0 + $0xc] sm:$0xf]
  %v22 = vld [vmem:[%s0 + $0x10] sm:$0xf]
  %v23 = vld [vmem:[%s0 + $0x14] sm:$0xf]
  %v24 = vld [vmem:[%s0 + $0x18] sm:$0xf]
  %v25 = vld [vmem:[%s0 + $0x1c] sm:$0xf]
  %v26 = vld [vmem:[%s1] sm:$0xf]
  %v27 = vld [vmem:[%s1 + $0x4] sm:$0xf]
  %v28 = vld [vmem:[%s2] sm:$0x1]
  %v30 = vperm.slane %v28, 0
  %v40 = vunpack.c.l.b16 %v18
  %v41 = vunpack.c.l.b16 %v19
  %v42 = vunpack.c.l.b16 %v20
  %v43 = vunpack.c.l.b16 %v21
  %v44 = vunpack.c.l.b16 %v22
  %v45 = vunpack.c.l.b16 %v23
  %v46 = vunpack.c.l.b16 %v24
  %v47 = vunpack.c.l.b16 %v25
  %v48 = vpack.c.b16 %v41, %v40
  %v49 = vpack.c.b16 %v43, %v42
  %v50 = vpack.c.b16 %v45, %v44
  %v51 = vpack.c.b16 %v47, %v46
  %v54 = vunpack.c.l.b16 %v26
  %v55 = vunpack.c.l.b16 %v27
  %v56 = vpack.c.b16 %v55, %v54
  %vm58 = vcmask 130048
  %v60 = vsel %vm58, %v48, 0
  %v63 = vsel %vm58, %v49, 0
  %v66 = vsel %vm58, %v50, 0
  %v69 = vsel %vm58, %v51, 0
  %71 = vmatpush.bf16.msra.mxu0 0
  %72 = vmatpush.bf16.msra.mxu0 0
  %73 = vmatpush.bf16.msra.mxu0 0
  %74 = vmatpush.bf16.msra.mxu0 0
  %75 = vmatpush.bf16.msra.mxu0 0
  %76 = vmatpush.bf16.msra.mxu0 0
  %77 = vmatpush.bf16.msra.mxu0 0
  %78 = vmatpush.bf16.msra.mxu0 %v56
  %79 = vmatmul.bf16.gmra.mxu0 %v60
  %v80 = vpop.f32.mrf.mxu0
  %v81 = vadd.f32 %v30, %v80
  %v82 = vpop.f32.mrf.mxu0
  %v83 = vadd.f32 %v30, %v82
  %84 = vmatmul.bf16.gmra.mxu0 %v63
  %v85 = vpop.f32.mrf.mxu0
  %v86 = vadd.f32 %v30, %v85
  %v87 = vpop.f32.mrf.mxu0
  %v88 = vadd.f32 %v30, %v87
  %89 = vmatmul.bf16.gmra.mxu0 %v66
  %v90 = vpop.f32.mrf.mxu0
  %v91 = vadd.f32 %v30, %v90
  %v92 = vpop.f32.mrf.mxu0
  %v93 = vadd.f32 %v30, %v92
  %94 = vmatmul.bf16.gmra.mxu0 %v69
  %v95 = vpop.f32.mrf.mxu0
  %v96 = vadd.f32 %v30, %v95
  %v97 = vpop.f32.mrf.mxu0
  %v98 = vadd.f32 %v30, %v97
  %99 = vdwg.mxu0
  %v100 = vld [vmem:[%s3] sm:$0xf]
  %v101 = vld [vmem:[%s3 + $0x4] sm:$0xf]
  %v102 = vld [vmem:[%s3 + $0x8] sm:$0xf]
  %v103 = vld [vmem:[%s3 + $0xc] sm:$0xf]
  %v108 = vunpack.c.l.b16 %v100
  %v109 = vunpack.c.l.b16 %v101
  %v110 = vunpack.c.l.b16 %v102
  %v111 = vunpack.c.l.b16 %v103
  %v112 = vpack.c.b16 %v109, %v108
  %v113 = vpack.c.b16 %v111, %v110
  %vm116 = vcmask 261120
  %v118 = vsel %vm116, 0, 0
  %120 = vmatpush.bf16.msra.mxu0 0
  %121 = vmatpush.bf16.msra.mxu0 0
  %122 = vmatpush.bf16.msra.mxu0 0
  %123 = vmatpush.bf16.msra.mxu0 0
  %124 = vmatpush.bf16.msra.mxu0 0
  %125 = vmatpush.bf16.msra.mxu0 0
  %126 = vmatpush.bf16.msra.mxu0 %v113
  %127 = vmatpush.bf16.msra.mxu0 %v112
  %128 = vmatmul.bf16.gmra.mxu0 %v118
  %v129 = vpop.f32.mrf.mxu0
  %v130 = vadd.f32 0.0, %v129
  %v131 = vpop.f32.mrf.mxu0
  %132 = vdwg.mxu0
  %v133 = vadd.f32 %v81, %v130
  %v134 = vxor.u32 %v133, 2147483648
  %v135 = vmul.f32 %v134, 1.442695
  %v136 = vpow.pop %v135
  %v137 = vadd.f32 %v136, 1.0
  %v138 = vrcp.pop %v137
  %v139 = vmul.f32 %v137, %v138
  %v140 = vsub.f32 1.0, %v139
  %v141 = vmul.f32 %v138, %v140
  %v142 = vadd.f32 %v138, %v141
  %vm143 = vweird.f32 %v137
  %vm144 = vweird.f32 %v138
  %vm145 = vmor %vm143, %vm144
  %v146 = vsel %vm145, %v138, %v142
  %v147 = vand.u32 2147483647, %v137
  %vm148 = vcmp.eq.f32.partialorder %v147, 8.507059e+37
  %v149 = vand.u32 %v137, 2147483648
  %v150 = vor.u32 1.1754944e-38, %v149
  %v151 = vsel %vm148, %v150, %v146
  %v152 = vmul.f32 1.0, %v151
  %v153 = vtanh.pop %v133
  %v154 = vmul.f32 %v152, 0.0
  %156 = vrot.lane.b32.xlu0 %v153, 32
  %v157 = vpop.permute.xlu0 %156
  %v159 = vmul.f32 %v152, %v157
  %161 = vrot.lane.b32.xlu0 %v159, 32
  %v162 = vpop.permute.xlu0 %161
  %v164 = vadd.f32 %v154, %v162
  %v165 = vtanh.pop %v164
  %167 = vrot.lane.b32.xlu0 %v165, 32
  %v168 = vpop.permute.xlu0 %167
  %v170 = vmul.f32 %v152, %v168
  %172 = vrot.lane.b32.xlu0 %v170, 64
  %v173 = vpop.permute.xlu0 %172
  %175 = vst.msk [vmem:[%s4] sm:$0xff] %vm116, %v173
  %v176 = vpack.c.bf16 %v170, %v170
  %178 = vrot.lane.b32.xlu0 %v176, 64
  %v179 = vpop.permute.xlu0 %178
  %v181 = vsel %vm116, %v179, 0
  %183 = vmatpush.bf16.msra.mxu0 0
  %184 = vmatpush.bf16.msra.mxu0 0
  %185 = vmatpush.bf16.msra.mxu0 0
  %186 = vmatpush.bf16.msra.mxu0 0
  %187 = vmatpush.bf16.msra.mxu0 0
  %188 = vmatpush.bf16.msra.mxu0 0
  %189 = vmatpush.bf16.msra.mxu0 %v113
  %190 = vmatpush.bf16.msra.mxu0 %v112
  %191 = vmatmul.bf16.gmra.mxu0 %v181
  %v192 = vpop.f32.mrf.mxu0
  %v193 = vadd.f32 0.0, %v192
  %v194 = vpop.f32.mrf.mxu0
  %195 = vdwg.mxu0
  %v196 = vadd.f32 %v83, %v193
  %v197 = vxor.u32 %v196, 2147483648
  %v198 = vmul.f32 %v197, 1.442695
  %v199 = vpow.pop %v198
  %v200 = vadd.f32 %v199, 1.0
  %v201 = vrcp.pop %v200
  %v202 = vmul.f32 %v200, %v201
  %v203 = vsub.f32 1.0, %v202
  %v204 = vmul.f32 %v201, %v203
  %v205 = vadd.f32 %v201, %v204
  %vm206 = vweird.f32 %v200
  %vm207 = vweird.f32 %v201
  %vm208 = vmor %vm206, %vm207
  %v209 = vsel %vm208, %v201, %v205
  %v210 = vand.u32 2147483647, %v200
  %vm211 = vcmp.eq.f32.partialorder %v210, 8.507059e+37
  %v212 = vand.u32 %v200, 2147483648
  %v213 = vor.u32 1.1754944e-38, %v212
  %v214 = vsel %vm211, %v213, %v209
  %v215 = vmul.f32 1.0, %v214
  %v216 = vtanh.pop %v196
  %v217 = vmul.f32 %v215, %v164
  %219 = vrot.lane.b32.xlu0 %v216, 32
  %v220 = vpop.permute.xlu0 %219
  %v222 = vmul.f32 %v215, %v220
  %224 = vrot.lane.b32.xlu0 %v222, 32
  %v225 = vpop.permute.xlu0 %224
  %v227 = vadd.f32 %v217, %v225
  %v228 = vtanh.pop %v227
  %230 = vrot.lane.b32.xlu0 %v228, 32
  %v231 = vpop.permute.xlu0 %230
  %v233 = vmul.f32 %v215, %v231
  %235 = vrot.lane.b32.xlu0 %v233, 96
  %v236 = vpop.permute.xlu0 %235
  %vm238 = vcmask 523520
  %239 = vst.msk [vmem:[%s4] sm:$0xff] %vm238, %v236
  %v240 = vpack.c.bf16 %v233, %v233
  %242 = vrot.lane.b32.xlu0 %v240, 64
  %v243 = vpop.permute.xlu0 %242
  %v245 = vsel %vm116, %v243, 0
  %247 = vmatpush.bf16.msra.mxu0 0
  %248 = vmatpush.bf16.msra.mxu0 0
  %249 = vmatpush.bf16.msra.mxu0 0
  %250 = vmatpush.bf16.msra.mxu0 0
  %251 = vmatpush.bf16.msra.mxu0 0
  %252 = vmatpush.bf16.msra.mxu0 0
  %253 = vmatpush.bf16.msra.mxu0 %v113
  %254 = vmatpush.bf16.msra.mxu0 %v112
  %255 = vmatmul.bf16.gmra.mxu0 %v245
  %v256 = vpop.f32.mrf.mxu0
  %v257 = vadd.f32 0.0, %v256
  %v258 = vpop.f32.mrf.mxu0
  %259 = vdwg.mxu0
  %v260 = vadd.f32 %v86, %v257
  %v261 = vxor.u32 %v260, 2147483648
  %v262 = vmul.f32 %v261, 1.442695
  %v263 = vpow.pop %v262
  %v264 = vadd.f32 %v263, 1.0
  %v265 = vrcp.pop %v264
  %v266 = vmul.f32 %v264, %v265
  %v267 = vsub.f32 1.0, %v266
  %v268 = vmul.f32 %v265, %v267
  %v269 = vadd.f32 %v265, %v268
  %vm270 = vweird.f32 %v264
  %vm271 = vweird.f32 %v265
  %vm272 = vmor %vm270, %vm271
  %v273 = vsel %vm272, %v265, %v269
  %v274 = vand.u32 2147483647, %v264
  %vm275 = vcmp.eq.f32.partialorder %v274, 8.507059e+37
  %v276 = vand.u32 %v264, 2147483648
  %v277 = vor.u32 1.1754944e-38, %v276
  %v278 = vsel %vm275, %v277, %v273
  %v279 = vmul.f32 1.0, %v278
  %v280 = vtanh.pop %v260
  %v281 = vmul.f32 %v279, %v227
  %283 = vrot.lane.b32.xlu0 %v280, 32
  %v284 = vpop.permute.xlu0 %283
  %v286 = vmul.f32 %v279, %v284
  %288 = vrot.lane.b32.xlu0 %v286, 32
  %v289 = vpop.permute.xlu0 %288
  %v291 = vadd.f32 %v281, %v289
  %v292 = vtanh.pop %v291
  %294 = vrot.lane.b32.xlu0 %v292, 32
  %v295 = vpop.permute.xlu0 %294
  %v297 = vmul.f32 %v279, %v295
  %vm298 = vcmask 785920
  %299 = vst.msk [vmem:[%s4] sm:$0xff] %vm298, %v297
  %v300 = vpack.c.bf16 %v297, %v297
  %302 = vrot.lane.b32.xlu0 %v300, 64
  %v303 = vpop.permute.xlu0 %302
  %v305 = vsel %vm116, %v303, 0
  %307 = vmatpush.bf16.msra.mxu0 0
  %308 = vmatpush.bf16.msra.mxu0 0
  %309 = vmatpush.bf16.msra.mxu0 0
  %310 = vmatpush.bf16.msra.mxu0 0
  %311 = vmatpush.bf16.msra.mxu0 0
  %312 = vmatpush.bf16.msra.mxu0 0
  %313 = vmatpush.bf16.msra.mxu0 %v113
  %314 = vmatpush.bf16.msra.mxu0 %v112
  %315 = vmatmul.bf16.gmra.mxu0 %v305
  %v316 = vpop.f32.mrf.mxu0
  %v317 = vadd.f32 0.0, %v316
  %v318 = vpop.f32.mrf.mxu0
  %319 = vdwg.mxu0
  %v320 = vadd.f32 %v88, %v317
  %v321 = vxor.u32 %v320, 2147483648
  %v322 = vmul.f32 %v321, 1.442695
  %v323 = vpow.pop %v322
  %v324 = vadd.f32 %v323, 1.0
  %v325 = vrcp.pop %v324
  %v326 = vmul.f32 %v324, %v325
  %v327 = vsub.f32 1.0, %v326
  %v328 = vmul.f32 %v325, %v327
  %v329 = vadd.f32 %v325, %v328
  %vm330 = vweird.f32 %v324
  %vm331 = vweird.f32 %v325
  %vm332 = vmor %vm330, %vm331
  %v333 = vsel %vm332, %v325, %v329
  %v334 = vand.u32 2147483647, %v324
  %vm335 = vcmp.eq.f32.partialorder %v334, 8.507059e+37
  %v336 = vand.u32 %v324, 2147483648
  %v337 = vor.u32 1.1754944e-38, %v336
  %v338 = vsel %vm335, %v337, %v333
  %v339 = vmul.f32 1.0, %v338
  %v340 = vtanh.pop %v320
  %v341 = vmul.f32 %v339, %v291
  %343 = vrot.lane.b32.xlu0 %v340, 32
  %v344 = vpop.permute.xlu0 %343
  %v346 = vmul.f32 %v339, %v344
  %348 = vrot.lane.b32.xlu0 %v346, 32
  %v349 = vpop.permute.xlu0 %348
  %v351 = vadd.f32 %v341, %v349
  %v352 = vtanh.pop %v351
  %354 = vrot.lane.b32.xlu0 %v352, 32
  %v355 = vpop.permute.xlu0 %354
  %v357 = vmul.f32 %v339, %v355
  %359 = vrot.lane.b32.xlu0 %v357, 32
  %v360 = vpop.permute.xlu0 %359
  %vm362 = vcmask 1048320
  %363 = vst.msk [vmem:[%s4] sm:$0xff] %vm362, %v360
  %v364 = vpack.c.bf16 %v357, %v357
  %366 = vrot.lane.b32.xlu0 %v364, 64
  %v367 = vpop.permute.xlu0 %366
  %v369 = vsel %vm116, %v367, 0
  %371 = vmatpush.bf16.msra.mxu0 0
  %372 = vmatpush.bf16.msra.mxu0 0
  %373 = vmatpush.bf16.msra.mxu0 0
  %374 = vmatpush.bf16.msra.mxu0 0
  %375 = vmatpush.bf16.msra.mxu0 0
  %376 = vmatpush.bf16.msra.mxu0 0
  %377 = vmatpush.bf16.msra.mxu0 %v113
  %378 = vmatpush.bf16.msra.mxu0 %v112
  %379 = vmatmul.bf16.gmra.mxu0 %v369
  %v380 = vpop.f32.mrf.mxu0
  %v381 = vadd.f32 0.0, %v380
  %v382 = vpop.f32.mrf.mxu0
  %383 = vdwg.mxu0
  %v384 = vadd.f32 %v91, %v381
  %v385 = vxor.u32 %v384, 2147483648
  %v386 = vmul.f32 %v385, 1.442695
  %v387 = vpow.pop %v386
  %v388 = vadd.f32 %v387, 1.0
  %v389 = vrcp.pop %v388
  %v390 = vmul.f32 %v388, %v389
  %v391 = vsub.f32 1.0, %v390
  %v392 = vmul.f32 %v389, %v391
  %v393 = vadd.f32 %v389, %v392
  %vm394 = vweird.f32 %v388
  %vm395 = vweird.f32 %v389
  %vm396 = vmor %vm394, %vm395
  %v397 = vsel %vm396, %v389, %v393
  %v398 = vand.u32 2147483647, %v388
  %vm399 = vcmp.eq.f32.partialorder %v398, 8.507059e+37
  %v400 = vand.u32 %v388, 2147483648
  %v401 = vor.u32 1.1754944e-38, %v400
  %v402 = vsel %vm399, %v401, %v397
  %v403 = vmul.f32 1.0, %v402
  %v404 = vtanh.pop %v384
  %v405 = vmul.f32 %v403, %v351
  %407 = vrot.lane.b32.xlu0 %v404, 32
  %v408 = vpop.permute.xlu0 %407
  %v410 = vmul.f32 %v403, %v408
  %412 = vrot.lane.b32.xlu0 %v410, 32
  %v413 = vpop.permute.xlu0 %412
  %v415 = vadd.f32 %v405, %v413
  %v416 = vtanh.pop %v415
  %418 = vrot.lane.b32.xlu0 %v416, 32
  %v419 = vpop.permute.xlu0 %418
  %v421 = vmul.f32 %v403, %v419
  %423 = vrot.lane.b32.xlu0 %v421, 64
  %v424 = vpop.permute.xlu0 %423
  %426 = vst.msk [vmem:[%s4 + $0x8] sm:$0xff] %vm116, %v424
  %v427 = vpack.c.bf16 %v421, %v421
  %429 = vrot.lane.b32.xlu0 %v427, 64
  %v430 = vpop.permute.xlu0 %429
  %v432 = vsel %vm116, %v430, 0
  %434 = vmatpush.bf16.msra.mxu0 0
  %435 = vmatpush.bf16.msra.mxu0 0
  %436 = vmatpush.bf16.msra.mxu0 0
  %437 = vmatpush.bf16.msra.mxu0 0
  %438 = vmatpush.bf16.msra.mxu0 0
  %439 = vmatpush.bf16.msra.mxu0 0
  %440 = vmatpush.bf16.msra.mxu0 %v113
  %441 = vmatpush.bf16.msra.mxu0 %v112
  %442 = vmatmul.bf16.gmra.mxu0 %v432
  %v443 = vpop.f32.mrf.mxu0
  %v444 = vadd.f32 0.0, %v443
  %v445 = vpop.f32.mrf.mxu0
  %446 = vdwg.mxu0
  %v447 = vadd.f32 %v93, %v444
  %v448 = vxor.u32 %v447, 2147483648
  %v449 = vmul.f32 %v448, 1.442695
  %v450 = vpow.pop %v449
  %v451 = vadd.f32 %v450, 1.0
  %v452 = vrcp.pop %v451
  %v453 = vmul.f32 %v451, %v452
  %v454 = vsub.f32 1.0, %v453
  %v455 = vmul.f32 %v452, %v454
  %v456 = vadd.f32 %v452, %v455
  %vm457 = vweird.f32 %v451
  %vm458 = vweird.f32 %v452
  %vm459 = vmor %vm457, %vm458
  %v460 = vsel %vm459, %v452, %v456
  %v461 = vand.u32 2147483647, %v451
  %vm462 = vcmp.eq.f32.partialorder %v461, 8.507059e+37
  %v463 = vand.u32 %v451, 2147483648
  %v464 = vor.u32 1.1754944e-38, %v463
  %v465 = vsel %vm462, %v464, %v460
  %v466 = vmul.f32 1.0, %v465
  %v467 = vtanh.pop %v447
  %v468 = vmul.f32 %v466, %v415
  %470 = vrot.lane.b32.xlu0 %v467, 32
  %v471 = vpop.permute.xlu0 %470
  %v473 = vmul.f32 %v466, %v471
  %475 = vrot.lane.b32.xlu0 %v473, 32
  %v476 = vpop.permute.xlu0 %475
  %v478 = vadd.f32 %v468, %v476
  %v479 = vtanh.pop %v478
  %481 = vrot.lane.b32.xlu0 %v479, 32
  %v482 = vpop.permute.xlu0 %481
  %v484 = vmul.f32 %v466, %v482
  %486 = vrot.lane.b32.xlu0 %v484, 96
  %v487 = vpop.permute.xlu0 %486
  %489 = vst.msk [vmem:[%s4 + $0x8] sm:$0xff] %vm238, %v487
  %v490 = vpack.c.bf16 %v484, %v484
  %492 = vrot.lane.b32.xlu0 %v490, 64
  %v493 = vpop.permute.xlu0 %492
  %v495 = vsel %vm116, %v493, 0
  %497 = vmatpush.bf16.msra.mxu0 0
  %498 = vmatpush.bf16.msra.mxu0 0
  %499 = vmatpush.bf16.msra.mxu0 0
  %500 = vmatpush.bf16.msra.mxu0 0
  %501 = vmatpush.bf16.msra.mxu0 0
  %502 = vmatpush.bf16.msra.mxu0 0
  %503 = vmatpush.bf16.msra.mxu0 %v113
  %504 = vmatpush.bf16.msra.mxu0 %v112
  %505 = vmatmul.bf16.gmra.mxu0 %v495
  %v506 = vpop.f32.mrf.mxu0
  %v507 = vadd.f32 0.0, %v506
  %v508 = vpop.f32.mrf.mxu0
  %509 = vdwg.mxu0
  %v510 = vadd.f32 %v96, %v507
  %v511 = vxor.u32 %v510, 2147483648
  %v512 = vmul.f32 %v511, 1.442695
  %v513 = vpow.pop %v512
  %v514 = vadd.f32 %v513, 1.0
  %v515 = vrcp.pop %v514
  %v516 = vmul.f32 %v514, %v515
  %v517 = vsub.f32 1.0, %v516
  %v518 = vmul.f32 %v515, %v517
  %v519 = vadd.f32 %v515, %v518
  %vm520 = vweird.f32 %v514
  %vm521 = vweird.f32 %v515
  %vm522 = vmor %vm520, %vm521
  %v523 = vsel %vm522, %v515, %v519
  %v524 = vand.u32 2147483647, %v514
  %vm525 = vcmp.eq.f32.partialorder %v524, 8.507059e+37
  %v526 = vand.u32 %v514, 2147483648
  %v527 = vor.u32 1.1754944e-38, %v526
  %v528 = vsel %vm525, %v527, %v523
  %v529 = vmul.f32 1.0, %v528
  %v530 = vtanh.pop %v510
  %v531 = vmul.f32 %v529, %v478
  %533 = vrot.lane.b32.xlu0 %v530, 32
  %v534 = vpop.permute.xlu0 %533
  %v536 = vmul.f32 %v529, %v534
  %538 = vrot.lane.b32.xlu0 %v536, 32
  %v539 = vpop.permute.xlu0 %538
  %v541 = vadd.f32 %v531, %v539
  %v542 = vtanh.pop %v541
  %544 = vrot.lane.b32.xlu0 %v542, 32
  %v545 = vpop.permute.xlu0 %544
  %v547 = vmul.f32 %v529, %v545
  %548 = vst.msk [vmem:[%s4 + $0x8] sm:$0xff] %vm298, %v547
  %v549 = vpack.c.bf16 %v547, %v547
  %551 = vrot.lane.b32.xlu0 %v549, 64
  %v552 = vpop.permute.xlu0 %551
  %v554 = vsel %vm116, %v552, 0
  %556 = vmatpush.bf16.msra.mxu0 0
  %557 = vmatpush.bf16.msra.mxu0 0
  %558 = vmatpush.bf16.msra.mxu0 0
  %559 = vmatpush.bf16.msra.mxu0 0
  %560 = vmatpush.bf16.msra.mxu0 0
  %561 = vmatpush.bf16.msra.mxu0 0
  %562 = vmatpush.bf16.msra.mxu0 %v113
  %563 = vmatpush.bf16.msra.mxu0 %v112
  %564 = vmatmul.bf16.gmra.mxu0 %v554
  %v565 = vpop.f32.mrf.mxu0
  %v566 = vadd.f32 0.0, %v565
  %v567 = vpop.f32.mrf.mxu0
  %568 = vdwg.mxu0
  %v569 = vadd.f32 %v98, %v566
  %v570 = vxor.u32 %v569, 2147483648
  %v571 = vmul.f32 %v570, 1.442695
  %v572 = vpow.pop %v571
  %v573 = vadd.f32 %v572, 1.0
  %v574 = vrcp.pop %v573
  %v575 = vmul.f32 %v573, %v574
  %v576 = vsub.f32 1.0, %v575
  %v577 = vmul.f32 %v574, %v576
  %v578 = vadd.f32 %v574, %v577
  %vm579 = vweird.f32 %v573
  %vm580 = vweird.f32 %v574
  %vm581 = vmor %vm579, %vm580
  %v582 = vsel %vm581, %v574, %v578
  %v583 = vand.u32 2147483647, %v573
  %vm584 = vcmp.eq.f32.partialorder %v583, 8.507059e+37
  %v585 = vand.u32 %v573, 2147483648
  %v586 = vor.u32 1.1754944e-38, %v585
  %v587 = vsel %vm584, %v586, %v582
  %v588 = vmul.f32 1.0, %v587
  %v589 = vtanh.pop %v569
  %v590 = vmul.f32 %v588, %v541
  %592 = vrot.lane.b32.xlu0 %v589, 32
  %v593 = vpop.permute.xlu0 %592
  %v595 = vmul.f32 %v588, %v593
  %597 = vrot.lane.b32.xlu0 %v595, 32
  %v598 = vpop.permute.xlu0 %597
  %v600 = vadd.f32 %v590, %v598
  %v601 = vtanh.pop %v600
  %603 = vrot.lane.b32.xlu0 %v601, 32
  %v604 = vpop.permute.xlu0 %603
  %v606 = vmul.f32 %v588, %v604
  %608 = vrot.lane.b32.xlu0 %v606, 32
  %v609 = vpop.permute.xlu0 %608
  %611 = vst.msk [vmem:[%s4 + $0x8] sm:$0xff] %vm362, %v609
  // Predicated region
  $region18: #{lstm_autoencoder_forward.1} parent=0 // pred_check
    _
  $region19: #{lstm_autoencoder_forward.1} parent=0 // pred_check_branch
    %613 = sbr.rel (0) target = $region21
  $region20: #{lstm_autoencoder_forward.1} parent=0 // pred_region
    _
  $region21: #{lstm_autoencoder_forward.1} parent=0 // pred_fallthru
    _
  // Predicated region
  $region22: #{lstm_autoencoder_forward.1} parent=0 // pred_check
    _
  $region23: #{lstm_autoencoder_forward.1} parent=0 // pred_check_branch
    %615 = sbr.rel (0) target = $region25
  $region24: #{lstm_autoencoder_forward.1} parent=0 // pred_region
    _
  $region25: #{lstm_autoencoder_forward.1} parent=0 // pred_fallthru
    _

</llo_original>
